<compile_context>
chip_gen: v5e
topology: v5e:2x2
jax: 0.10.0
libtpu: 0.0.40
codegen_flags: <defaults>
</compile_context>

<pallas_src>
import functools

import jax
import jax.numpy as jnp
from jax.experimental import pallas as pl
from jax.experimental.pallas import tpu as pltpu


def _int_pow(x, g):
    """x ** g for small non-negative integer g via a multiply chain (pure VPU)."""
    result = jnp.ones_like(x)
    base = x
    while g > 0:
        if g & 1:
            result = result * base
        g >>= 1
        if g:
            base = base * base
    return result


def _focal_loss_kernel(logits_ref, targets_ref, out_ref, acc_ref, *,
                       alpha, gamma, n_valid, n_classes, pack, tile_rows,
                       tiles_per_part, total_tiles):
    p = pl.program_id(0)
    t = pl.program_id(1)

    @pl.when(t == 0)
    def _init():
        acc_ref[...] = jnp.zeros_like(acc_ref)

    global_tile = p * tiles_per_part + t
    is_real = global_tile < total_tiles      # overshoot steps (clamped block) are skipped

    @pl.when(is_real)
    def _compute():
        x = logits_ref[...].astype(jnp.float32)          # (R, width), cast in-kernel
        tgt = targets_ref[...]                           # (R, pack) int32
        width = x.shape[-1]

        # Stabilizing max over the whole packed row (shared by its `pack` samples).
        # TODO(synk): exact per-segment max (roll-tree or matmul compress/broadcast).
        m = jnp.max(x, axis=-1, keepdims=True)           # (R, 1)
        e = jnp.exp(x - m)                               # (R, width), lane-dense EUP

        if pack == 1:
            s = jnp.sum(e, axis=-1, keepdims=True)                        # (R, 1)
            lane = jax.lax.broadcasted_iota(jnp.int32, x.shape, 1)
            hit = lane == tgt                                             # (R, width)
            x_t = jnp.sum(jnp.where(hit, x, 0.0), axis=-1, keepdims=True)
        else:
            # 0/1 segment-membership matrix (pack, width); segmented sums and the
            # per-segment target broadcast run on the otherwise-idle MXU.
            seg_i = jax.lax.broadcasted_iota(jnp.int32, (pack, width), 0)
            lane_i = jax.lax.broadcasted_iota(jnp.int32, (pack, width), 1)
            lo = seg_i * n_classes
            segb = jnp.logical_and(lane_i >= lo, lane_i < lo + n_classes
                                   ).astype(jnp.float32)                  # (pack, width)

            s = jax.lax.dot_general(e, segb, (((1,), (1,)), ((), ())),
                                    preferred_element_type=jnp.float32)   # (R, pack)

            seg_off = jax.lax.broadcasted_iota(jnp.int32, (1, pack), 1) * n_classes
            tgt_lane = (tgt + seg_off).astype(jnp.float32)                # (R, pack)
            tgt_lane_b = jax.lax.dot_general(tgt_lane, segb,
                                             (((1,), (0,)), ((), ())),
                                             preferred_element_type=jnp.float32)
            lane = jax.lax.broadcasted_iota(jnp.int32, x.shape, 1)
            hit = lane == tgt_lane_b.astype(jnp.int32)                    # (R, width)
            x_t = jax.lax.dot_general(jnp.where(hit, x, 0.0), segb,
                                      (((1,), (1,)), ((), ())),
                                      preferred_element_type=jnp.float32)  # (R, pack)

        s = jnp.maximum(s, jnp.float32(1e-37))   # guard pathological denominator underflow
        lse = m + jnp.log(s)                     # per-sample log-sum-exp
        ce = lse - x_t                           # cross entropy  (-log p_target)
        pt = jnp.exp(x_t - lse)                  # exp(-ce) exactly; no approx reciprocal

        w = 1.0 - pt
        if float(gamma) == float(int(gamma)) and int(gamma) >= 0:
            fw = _int_pow(w, int(gamma))                     # gamma=2 -> w*w on the VPU
        else:
            fw = jnp.maximum(w, 0.0) ** jnp.float32(gamma)   # clamp: pt may round above 1

        f = jnp.float32(alpha) * fw * ce         # (R, pack)

        # Mask original rows past N (wrapper pack-padding and trailing block padding).
        r_i = jax.lax.broadcasted_iota(jnp.int32, f.shape, 0)
        c_i = jax.lax.broadcasted_iota(jnp.int32, f.shape, 1)
        orig_row = (global_tile * tile_rows + r_i) * pack + c_i
        f = jnp.where(orig_row < n_valid, f, 0.0)

        acc_ref[...] += f                        # elementwise; reduced once at the end

    @pl.when(t == pl.num_programs(1) - 1)
    def _finalize():
        total = jnp.sum(acc_ref[...], axis=0, keepdims=True)    # (1, pack)
        total = jnp.sum(total, axis=1, keepdims=True)           # (1, 1)
        out_ref[...] = jnp.broadcast_to(total, out_ref.shape)   # lane-dense (8,128) store


def _chip_defaults():
    """(num_partitions, vmem budget for one block's working set) per TPU generation."""
    kind = ""
    try:
        kind = jax.devices()[0].device_kind.lower()
    except Exception:
        pass
    if "v7" in kind or "7x" in kind:
        return 2, 16 * 1024 * 1024    # dual TensorCore, ~3.2 TB/s HBM -> bigger blocks
    if "v5 lite" in kind or "v5e" in kind or "v5litepod" in kind:
        return 1, 6 * 1024 * 1024     # single TC, 16 MiB default scoped VMEM -> small blocks
    return 1, 10 * 1024 * 1024        # v4 / v5p / v6e: single TC per pallas grid


def _choose_tile_rows(rows, width, pack, in_bytes, budget_bytes):
    per_row = (2 * width * in_bytes     # double-buffered logits block (input dtype)
               + 2 * 128 * 4            # double-buffered targets block (int32, lane-padded)
               + 5 * width * 4          # in-kernel f32 temporaries (x, e, selects, ...)
               + pack * 4)              # resident f32 accumulator
    r = (budget_bytes // per_row) // 8 * 8
    r = max(8, r)
    return rows if r >= rows else r


def focal_loss(logits, targets, alpha=1.0, gamma=2.0,
               tile_rows=None, num_partitions=None, vmem_budget_bytes=None):
    """Mean multiclass focal loss == FocalLoss(alpha, gamma, logits=False, reduce=True).

    logits: (N, C) float array (native dtype OK); targets: (N,) int class indices.
    """
    n, c = logits.shape
    pack = max(1, 128 // c)
    width = pack * c

    n_pad = pl.cdiv(n, pack) * pack
    tgt = targets.astype(jnp.int32)
    if n_pad != n:
        logits = jnp.pad(logits, ((0, n_pad - n), (0, 0)))
        tgt = jnp.pad(tgt, ((0, n_pad - n),))
    rows = n_pad // pack
    x2 = logits.reshape(rows, width)        # free row-major reshape (lane-dense packing)
    t2 = tgt.reshape(rows, pack)

    default_parts, default_budget = _chip_defaults()
    if num_partitions is None:
        num_partitions = default_parts
    if vmem_budget_bytes is None:
        vmem_budget_bytes = default_budget

    in_bytes = jnp.dtype(logits.dtype).itemsize
    if tile_rows is None:
        tile_rows = _choose_tile_rows(rows, width, pack, in_bytes, vmem_budget_bytes)
    else:
        tile_rows = min(int(tile_rows), rows)
        if tile_rows < rows:
            tile_rows = min(rows, max(8, (tile_rows // 8) * 8))

    total_tiles = pl.cdiv(rows, tile_rows)
    num_partitions = max(1, min(int(num_partitions), total_tiles))
    tiles_per_part = pl.cdiv(total_tiles, num_partitions)

    def in_block(p, t):
        # Overshoot steps revisit the partition's own last real block (no extra DMA);
        # their compute is skipped inside the kernel.
        part_last = jnp.minimum((p + 1) * tiles_per_part, total_tiles) - 1
        return (jnp.minimum(p * tiles_per_part + t, part_last), 0)

    kernel = functools.partial(
        _focal_loss_kernel,
        alpha=float(alpha), gamma=float(gamma), n_valid=n, n_classes=c,
        pack=pack, tile_rows=tile_rows,
        tiles_per_part=tiles_per_part, total_tiles=total_tiles)

    partials = pl.pallas_call(
        kernel,
        out_shape=jax.ShapeDtypeStruct((num_partitions * 8, 128), jnp.float32),
        grid=(num_partitions, tiles_per_part),
        in_specs=[
            pl.BlockSpec((tile_rows, width), in_block),   # packed logits, native dtype
            pl.BlockSpec((tile_rows, pack), in_block),    # packed targets (int32)
        ],
        out_specs=pl.BlockSpec((8, 128), lambda p, t: (p, 0)),
        scratch_shapes=[pltpu.VMEM((tile_rows, pack), jnp.float32)],
        compiler_params=pltpu.CompilerParams(
            dimension_semantics=("parallel", "arbitrary"),
            vmem_limit_bytes=32 * 1024 * 1024,
        ),
    )(x2, t2)

    per_part = partials.reshape(num_partitions, 8, 128)[:, 0, 0]
    return jnp.sum(per_part) / jnp.float32(n)


def _focal_loss_ref(logits, targets, alpha=1.0, gamma=2.0):
    # pure-JAX reference for sanity check
    logp = jax.nn.log_softmax(logits.astype(jnp.float32), axis=-1)
    ce = -jnp.take_along_axis(logp, targets[:, None].astype(jnp.int32), axis=-1)[:, 0]
    pt = jnp.exp(-ce)
    return jnp.mean(alpha * (1.0 - pt) ** gamma * ce)


if __name__ == "__main__":
    key = jax.random.PRNGKey(0)
    ks = jax.random.split(key, 10)

    # 1) small f32, packed path (C=32 -> pack=4), single tile / single partition
    N, C = 8, 32
    logits = jax.random.normal(ks[0], (N, C), dtype=jnp.float32)
    targets = jax.random.randint(ks[1], (N,), 0, C, dtype=jnp.int32)
    out = jax.block_until_ready(focal_loss(logits, targets, alpha=1.0, gamma=2.0))
    ref = _focal_loss_ref(logits, targets, alpha=1.0, gamma=2.0)
    assert jnp.allclose(out, ref, atol=2e-3, rtol=2e-3), (out, ref)

    # 2) multi-tile + 2 partitions: non-divisible N exercises pack-padding, partial last
    #    tile masking, and the gated overshoot grid step on the partitioned axis.
    N2, C2 = 150, 32
    logits2 = jax.random.normal(ks[2], (N2, C2), dtype=jnp.float32)
    targets2 = jax.random.randint(ks[3], (N2,), 0, C2, dtype=jnp.int32)
    out2 = jax.block_until_ready(
        focal_loss(logits2, targets2, alpha=0.5, gamma=2.0, tile_rows=8, num_partitions=2))
    ref2 = _focal_loss_ref(logits2, targets2, alpha=0.5, gamma=2.0)
    assert jnp.allclose(out2, ref2, atol=2e-3, rtol=2e-3), (out2, ref2)

    # 3) bf16 logits passed straight through (no wrapper-side f32 cast)
    N3, C3 = 64, 32
    logits3 = jax.random.normal(ks[4], (N3, C3), dtype=jnp.bfloat16)
    targets3 = jax.random.randint(ks[5], (N3,), 0, C3, dtype=jnp.int32)
    out3 = jax.block_until_ready(focal_loss(logits3, targets3, alpha=1.0, gamma=2.0))
    ref3 = _focal_loss_ref(logits3, targets3, alpha=1.0, gamma=2.0)
    assert jnp.allclose(out3, ref3, atol=1e-2, rtol=1e-2), (out3, ref3)

    # 4) unpacked path (C >= 128) + fractional gamma (pow fallback with w clamp)
    N4, C4 = 16, 160
    logits4 = jax.random.normal(ks[6], (N4, C4), dtype=jnp.float32)
    targets4 = jax.random.randint(ks[7], (N4,), 0, C4, dtype=jnp.int32)
    out4 = jax.block_until_ready(focal_loss(logits4, targets4, alpha=1.0, gamma=1.5))
    ref4 = _focal_loss_ref(logits4, targets4, alpha=1.0, gamma=1.5)
    assert jnp.allclose(out4, ref4, atol=2e-3, rtol=2e-3), (out4, ref4)

    # 5) non-power-of-two class count with heavy pack padding (C=10 -> pack=12)
    N5, C5 = 13, 10
    logits5 = jax.random.normal(ks[8], (N5, C5), dtype=jnp.float32)
    targets5 = jax.random.randint(ks[9], (N5,), 0, C5, dtype=jnp.int32)
    out5 = jax.block_until_ready(focal_loss(logits5, targets5, alpha=1.0, gamma=2.0))
    ref5 = _focal_loss_ref(logits5, targets5, alpha=1.0, gamma=2.0)
    assert jnp.allclose(out5, ref5, atol=2e-3, rtol=2e-3), (out5, ref5)

    print("KERNEL_OK")
</pallas_src>

<mosaic_0001>
module attributes {stable_mosaic.version = 11 : i64} {
  func.func @_focal_loss_kernel(%arg0: i32, %arg1: i32, %arg2: memref<2x128xf32, #tpu.memory_space<vmem>>, %arg3: memref<2x4xi32, #tpu.memory_space<vmem>>, %arg4: memref<8x128xf32, #tpu.memory_space<vmem>>, %arg5: memref<2x4xf32, #tpu.memory_space<vmem>>) attributes {dimension_semantics = [#tpu.dimension_semantics<parallel>, #tpu.dimension_semantics<arbitrary>], iteration_bounds = array<i64: 1, 1>, scalar_prefetch = 0 : i64, scratch_operands = 1 : i64, tpu.core_type = #tpu.core_type<tc>, window_params = [{transform_indices = @transform_0, window_bounds = array<i64: 2, 128>}, {transform_indices = @transform_1, window_bounds = array<i64: 2, 4>}, {transform_indices = @transform_2, window_bounds = array<i64: 8, 128>}]} {
    %c0_i32 = arith.constant 0 : i32
    %0 = arith.cmpi eq, %arg1, %c0_i32 : i32
    %1 = arith.extui %0 : i1 to i32
    %c0_i32_0 = arith.constant 0 : i32
    %2 = arith.cmpi ne, %1, %c0_i32_0 : i32
    scf.if %2 {
      %cst = arith.constant 0.000000e+00 : f32
      %11 = vector.broadcast %cst : f32 to vector<2x4xf32>
      %c0 = arith.constant 0 : index
      %c0_5 = arith.constant 0 : index
      %12 = vector.load %arg5[%c0, %c0_5] : memref<2x4xf32, #tpu.memory_space<vmem>>, vector<2x4xf32>
      tpu.vector_store %arg5[%c0, %c0_5], %11 {strides = array<i32>} : memref<2x4xf32, #tpu.memory_space<vmem>>, vector<2x4xf32>,
    } else {
    }
    %c1_i32 = arith.constant 1 : i32
    %3 = arith.muli %arg0, %c1_i32 : i32
    %4 = arith.addi %3, %arg1 : i32
    %c1_i32_1 = arith.constant 1 : i32
    %5 = arith.cmpi slt, %4, %c1_i32_1 : i32
    %6 = arith.extui %5 : i1 to i32
    %c0_i32_2 = arith.constant 0 : i32
    %7 = arith.cmpi ne, %6, %c0_i32_2 : i32
    scf.if %7 {
      %c0 = arith.constant 0 : index
      %c0_5 = arith.constant 0 : index
      %11 = vector.load %arg2[%c0, %c0_5] : memref<2x128xf32, #tpu.memory_space<vmem>>, vector<2x128xf32>
      %c0_6 = arith.constant 0 : index
      %c0_7 = arith.constant 0 : index
      %12 = vector.load %arg3[%c0_6, %c0_7] : memref<2x4xi32, #tpu.memory_space<vmem>>, vector<2x4xi32>
      %cst = arith.constant dense<0xFF800000> : vector<2xf32>
      %13 = vector.multi_reduction <maximumf>, %11, %cst [1] : vector<2x128xf32> to vector<2xf32>
      %14 = vector.shape_cast %13 : vector<2xf32> to vector<2x1xf32>
      %15 = vector.broadcast %14 : vector<2x1xf32> to vector<2x128xf32>
      %16 = arith.subf %11, %15 : vector<2x128xf32>
      %17 = math.exp %16 : vector<2x128xf32>
      %18 = tpu.iota {dimensions = array<i32: 0>} : vector<4x128xi32>
      %19 = tpu.iota {dimensions = array<i32: 1>} : vector<4x128xi32>
      %c32_i32 = arith.constant 32 : i32
      %20 = vector.broadcast %c32_i32 : i32 to vector<4x128xi32>
      %21 = arith.muli %18, %20 : vector<4x128xi32>
      %22 = arith.cmpi sge, %19, %21 : vector<4x128xi32>
      %c32_i32_8 = arith.constant 32 : i32
      %23 = vector.broadcast %c32_i32_8 : i32 to vector<4x128xi32>
      %24 = arith.addi %21, %23 : vector<4x128xi32>
      %25 = arith.cmpi slt, %19, %24 : vector<4x128xi32>
      %26 = arith.andi %22, %25 : vector<4x128xi1>
      %27 = arith.extui %26 : vector<4x128xi1> to vector<4x128xi32>
      %28 = arith.sitofp %27 : vector<4x128xi32> to vector<4x128xf32>
      %cst_9 = arith.constant dense<0.000000e+00> : vector<2x4xf32>
      %29 = tpu.matmul %17, %28, %cst_9 {dimension_numbers = #tpu.dot_dimension_numbers<[1], [1], [0], [0], [0, 0, 1, 0], [], []>} : vector<2x128xf32>, vector<4x128xf32>, vector<2x4xf32> -> vector<2x4xf32>
      %30 = tpu.iota {dimensions = array<i32: 1>} : vector<1x4xi32>
      %c32_i32_10 = arith.constant 32 : i32
      %31 = vector.broadcast %c32_i32_10 : i32 to vector<1x4xi32>
      %32 = arith.muli %30, %31 : vector<1x4xi32>
      %33 = vector.broadcast %32 : vector<1x4xi32> to vector<2x4xi32>
      %34 = arith.addi %12, %33 : vector<2x4xi32>
      %35 = arith.sitofp %34 : vector<2x4xi32> to vector<2x4xf32>
      %cst_11 = arith.constant dense<0.000000e+00> : vector<2x128xf32>
      %36 = tpu.matmul %35, %28, %cst_11 {dimension_numbers = #tpu.dot_dimension_numbers<[1], [0], [0], [1], [0, 0, 1, 1], [], []>} : vector<2x4xf32>, vector<4x128xf32>, vector<2x128xf32> -> vector<2x128xf32>
      %37 = tpu.iota {dimensions = array<i32: 1>} : vector<2x128xi32>
      %38 = arith.fptosi %36 : vector<2x128xf32> to vector<2x128xi32>
      %39 = arith.cmpi eq, %37, %38 : vector<2x128xi32>
      %cst_12 = arith.constant 0.000000e+00 : f32
      %40 = vector.broadcast %cst_12 : f32 to vector<2x128xf32>
      %41 = arith.select %39, %11, %40 : vector<2x128xi1>, vector<2x128xf32>
      %cst_13 = arith.constant dense<0.000000e+00> : vector<2x4xf32>
      %42 = tpu.matmul %41, %28, %cst_13 {dimension_numbers = #tpu.dot_dimension_numbers<[1], [1], [0], [0], [0, 0, 1, 0], [], []>} : vector<2x128xf32>, vector<4x128xf32>, vector<2x4xf32> -> vector<2x4xf32>
      %cst_14 = arith.constant 9.99999991E-38 : f32
      %43 = vector.broadcast %cst_14 : f32 to vector<2x4xf32>
      %44 = arith.maximumf %29, %43 : vector<2x4xf32>
      %45 = math.log %44 : vector<2x4xf32>
      %46 = vector.broadcast %14 : vector<2x1xf32> to vector<2x4xf32>
      %47 = arith.addf %46, %45 : vector<2x4xf32>
      %48 = arith.subf %47, %42 : vector<2x4xf32>
      %49 = arith.subf %42, %47 : vector<2x4xf32>
      %50 = math.exp %49 : vector<2x4xf32>
      %cst_15 = arith.constant 1.000000e+00 : f32
      %51 = vector.broadcast %cst_15 : f32 to vector<2x4xf32>
      %52 = arith.subf %51, %50 : vector<2x4xf32>
      %cst_16 = arith.constant 1.000000e+00 : f32
      %53 = vector.broadcast %cst_16 : f32 to vector<2x4xf32>
      %54 = arith.mulf %52, %52 : vector<2x4xf32>
      %55 = arith.mulf %53, %54 : vector<2x4xf32>
      %cst_17 = arith.constant 1.000000e+00 : f32
      %56 = vector.broadcast %cst_17 : f32 to vector<2x4xf32>
      %57 = arith.mulf %56, %55 : vector<2x4xf32>
      %58 = arith.mulf %57, %48 : vector<2x4xf32>
      %59 = tpu.iota {dimensions = array<i32: 0>} : vector<2x4xi32>
      %60 = tpu.iota {dimensions = array<i32: 1>} : vector<2x4xi32>
      %c2_i32 = arith.constant 2 : i32
      %61 = arith.muli %4, %c2_i32 : i32
      %62 = vector.broadcast %61 : i32 to vector<2x4xi32>
      %63 = arith.addi %62, %59 : vector<2x4xi32>
      %c4_i32 = arith.constant 4 : i32
      %64 = vector.broadcast %c4_i32 : i32 to vector<2x4xi32>
      %65 = arith.muli %63, %64 : vector<2x4xi32>
      %66 = arith.addi %65, %60 : vector<2x4xi32>
      %c8_i32 = arith.constant 8 : i32
      %67 = vector.broadcast %c8_i32 : i32 to vector<2x4xi32>
      %68 = arith.cmpi slt, %66, %67 : vector<2x4xi32>
      %cst_18 = arith.constant 0.000000e+00 : f32
      %69 = vector.broadcast %cst_18 : f32 to vector<2x4xf32>
      %70 = arith.select %68, %58, %69 : vector<2x4xi1>, vector<2x4xf32>
      %c0_19 = arith.constant 0 : index
      %c0_20 = arith.constant 0 : index
      %71 = vector.load %arg5[%c0_19, %c0_20] : memref<2x4xf32, #tpu.memory_space<vmem>>, vector<2x4xf32>
      %72 = arith.addf %71, %70 : vector<2x4xf32>
      %c0_21 = arith.constant 0 : index
      %c0_22 = arith.constant 0 : index
      %73 = vector.load %arg5[%c0_21, %c0_22] : memref<2x4xf32, #tpu.memory_space<vmem>>, vector<2x4xf32>
      tpu.vector_store %arg5[%c0_21, %c0_22], %72 {strides = array<i32>} : memref<2x4xf32, #tpu.memory_space<vmem>>, vector<2x4xf32>,
    } else {
    }
    %c0_i32_3 = arith.constant 0 : i32
    %8 = arith.cmpi eq, %arg1, %c0_i32_3 : i32
    %9 = arith.extui %8 : i1 to i32
    %c0_i32_4 = arith.constant 0 : i32
    %10 = arith.cmpi ne, %9, %c0_i32_4 : i32
    scf.if %10 {
      %c0 = arith.constant 0 : index
      %c0_5 = arith.constant 0 : index
      %11 = vector.load %arg5[%c0, %c0_5] : memref<2x4xf32, #tpu.memory_space<vmem>>, vector<2x4xf32>
      %cst = arith.constant dense<0.000000e+00> : vector<4xf32>
      %12 = vector.multi_reduction <add>, %11, %cst [0] : vector<2x4xf32> to vector<4xf32>
      %13 = vector.shape_cast %12 : vector<4xf32> to vector<1x4xf32>
      %cst_6 = arith.constant dense<0.000000e+00> : vector<1xf32>
      %14 = vector.multi_reduction <add>, %13, %cst_6 [1] : vector<1x4xf32> to vector<1xf32>
      %15 = vector.shape_cast %14 : vector<1xf32> to vector<1x1xf32>
      %16 = vector.shape_cast %15 : vector<1x1xf32> to vector<1x1xf32>
      %17 = vector.broadcast %16 : vector<1x1xf32> to vector<8x128xf32>
      %c0_7 = arith.constant 0 : index
      %c0_8 = arith.constant 0 : index
      %18 = vector.load %arg4[%c0_7, %c0_8] : memref<8x128xf32, #tpu.memory_space<vmem>>, vector<8x128xf32>
      tpu.vector_store %arg4[%c0_7, %c0_8], %17 {strides = array<i32>} : memref<8x128xf32, #tpu.memory_space<vmem>>, vector<8x128xf32>,
    } else {
    }
    return
  }
  func.func @transform_0(%arg0: i32, %arg1: i32) -> (i32, i32) {
    %c1_i32 = arith.constant 1 : i32
    %0 = arith.addi %arg0, %c1_i32 : i32
    %c1_i32_0 = arith.constant 1 : i32
    %1 = arith.muli %0, %c1_i32_0 : i32
    %c1_i32_1 = arith.constant 1 : i32
    %2 = arith.minsi %1, %c1_i32_1 : i32
    %c1_i32_2 = arith.constant 1 : i32
    %3 = arith.subi %2, %c1_i32_2 : i32
    %c1_i32_3 = arith.constant 1 : i32
    %4 = arith.muli %arg0, %c1_i32_3 : i32
    %5 = arith.addi %4, %arg1 : i32
    %6 = arith.minsi %5, %3 : i32
    %c0_i32 = arith.constant 0 : i32
    %c0_i32_4 = arith.constant 0 : i32
    return %6, %c0_i32 : i32, i32
  }
  func.func @transform_1(%arg0: i32, %arg1: i32) -> (i32, i32) {
    %c1_i32 = arith.constant 1 : i32
    %0 = arith.addi %arg0, %c1_i32 : i32
    %c1_i32_0 = arith.constant 1 : i32
    %1 = arith.muli %0, %c1_i32_0 : i32
    %c1_i32_1 = arith.constant 1 : i32
    %2 = arith.minsi %1, %c1_i32_1 : i32
    %c1_i32_2 = arith.constant 1 : i32
    %3 = arith.subi %2, %c1_i32_2 : i32
    %c1_i32_3 = arith.constant 1 : i32
    %4 = arith.muli %arg0, %c1_i32_3 : i32
    %5 = arith.addi %4, %arg1 : i32
    %6 = arith.minsi %5, %3 : i32
    %c0_i32 = arith.constant 0 : i32
    %c0_i32_4 = arith.constant 0 : i32
    return %6, %c0_i32 : i32, i32
  }
  func.func @transform_2(%arg0: i32, %arg1: i32) -> (i32, i32) {
    %c0_i32 = arith.constant 0 : i32
    %c0_i32_0 = arith.constant 0 : i32
    return %arg0, %c0_i32 : i32, i32
  }
}

</mosaic_0001>

<llo_original>
// kernel: tpu_custom_call.1
$region0: #{tpu_custom_call.1}
  #allocation0 [shape = 'u32[]', space=smem, size = 0x4, offset = 0x4, fixed_abs, tag = 'smem constant byte address 0x4 - core index']
  #allocation1 [shape = 'u32[72,128]{1,0:T(1,128)}', space=vmem, size = 0x9000, scoped, tag = 'internal scratch']
  #allocation2 [shape = 'f32[2,4]{1,0:T(2,128)}', space=vmem, size = 0x400, scoped, tag = 'scratch operand']
  %s0 = inlined_call_operand.hbm [shape: f32[2,128], index: 0, kind: input, shape index: {}]
  %s1 = inlined_call_operand.hbm [shape: s32[2,4], index: 1, kind: input, shape index: {}]
  %s2 = inlined_call_operand.hbm [shape: f32[8,128], index: 2, kind: output, shape index: {}]
  %s3 = sld [smem:[#allocation0]]
  $region38: #{tpu_custom_call.1} parent=0
    _
  %s5 = ssub.s32 1, %s3
  %s6 = scalar_select 0, %s5, %s3
  $region1: #{tpu_custom_call.1} parent=0
    #allocation3 [shape = 'u8[1024]{0}', space=vmem, size = 0x400, scoped, tag = 'input window, operand 0, single buffered']
    #allocation4 [shape = 's32[1]{0}', space=sflag, size = 0x4, scoped, tag = 'scoped memory for tpu_custom_call.1']
    #allocation5 [shape = 's32[1]{0}', space=sflag, size = 0x4, scoped, tag = 'scoped memory for tpu_custom_call.1']
    #allocation6 [shape = 'u8[1024]{0}', space=vmem, size = 0x400, scoped, tag = 'input window, operand 1, single buffered']
    #allocation7 [shape = 's32[1]{0}', space=sflag, size = 0x4, scoped, tag = 'scoped memory for tpu_custom_call.1']
    #allocation8 [shape = 'u8[4096]{0}', space=vmem, size = 0x1000, scoped, tag = 'output window, operand 0, single buffered']
    %7 = vsyncpa [#allocation4], 0
    %8 = vsyncpa [#allocation7], 0
    %9 = vsyncpa [#allocation5], 0
    // Predicated region
    $region2: #{tpu_custom_call.1} parent=1 // pred_check
      _
    $region3: #{tpu_custom_call.1} parent=1 // pred_check_branch
      %11 = sbr.rel (0) target = $region5
    $region4: #{tpu_custom_call.1} parent=1 // pred_region
      %s12 = sadd.s32 0, 1
      %p13 = scmp.lt.s32.totalorder %s12, 1
      %s14 = scalar_select %p13, %s12, 1
      %s15 = ssub.s32 %s14, 1
      %s16 = sadd.s32 0, 0
      %p17 = scmp.lt.s32.totalorder %s16, %s15
      %s18 = scalar_select %p17, %s16, %s15
      %20 = vsyncadd [#allocation4], 0
      %s21 = smul.addr %s18, 2
      %s22 = scalar_lea.hbm %s0, %s21
      %s24 = sshll.u32 %s22, 4
      %s25 = int_to_ptr.hbm [resolvable:$true] %s24
      %s26 = sshll.u32 [#allocation3], 4
      %s27 = int_to_ptr.vmem [resolvable:$true] %s26
      %29 = dma.hbm_to_vmem [thread:$0]  %s25, 32, %s27, [#allocation4]
    $region5: #{tpu_custom_call.1} parent=1 // pred_fallthru
      _
    // Predicated region
    $region6: #{tpu_custom_call.1} parent=1 // pred_check
      _
    $region7: #{tpu_custom_call.1} parent=1 // pred_check_branch
      %31 = sbr.rel (0) target = $region9
    $region8: #{tpu_custom_call.1} parent=1 // pred_region
      %s32 = sadd.s32 0, 1
      %p33 = scmp.lt.s32.totalorder %s32, 1
      %s34 = scalar_select %p33, %s32, 1
      %s35 = ssub.s32 %s34, 1
      %s36 = sadd.s32 0, 0
      %p37 = scmp.lt.s32.totalorder %s36, %s35
      %s38 = scalar_select %p37, %s36, %s35
      %40 = vsyncadd [#allocation7], 0
      %s41 = smul.addr %s38, 2
      %s42 = scalar_lea.hbm %s1, %s41
      %s44 = sshll.u32 %s42, 4
      %s45 = int_to_ptr.hbm [resolvable:$true] %s44
      %s46 = sshll.u32 [#allocation6], 4
      %s47 = int_to_ptr.vmem [resolvable:$true] %s46
      %49 = dma.hbm_to_vmem [thread:$0]  %s45, 32, %s47, [#allocation7]
    $region9: #{tpu_custom_call.1} parent=1 // pred_fallthru
      _
    // Predicated region
    $region10: #{tpu_custom_call.1} parent=1 // pred_check
      _
    $region11: #{tpu_custom_call.1} parent=1 // pred_check_branch
      %51 = sbr.rel (0) target = $region13
    $region12: #{tpu_custom_call.1} parent=1 // pred_region
      %53 = dma.done [#allocation4], 32
    $region13: #{tpu_custom_call.1} parent=1 // pred_fallthru
      _
    // Predicated region
    $region14: #{tpu_custom_call.1} parent=1 // pred_check
      _
    $region15: #{tpu_custom_call.1} parent=1 // pred_check_branch
      %55 = sbr.rel (0) target = $region17
    $region16: #{tpu_custom_call.1} parent=1 // pred_region
      %57 = dma.done [#allocation7], 32
    $region17: #{tpu_custom_call.1} parent=1 // pred_fallthru
      _
    %s58 = sadd.s32 0, 1
    %p59 = scmp.lt.s32.totalorder %s58, 1
    %s60 = scalar_select %p59, %s58, 1
    %s61 = ssub.s32 %s60, 1
    %s62 = sadd.s32 0, 0
    %p63 = scmp.lt.s32.totalorder %s62, %s61
    %s64 = scalar_select %p63, %s62, %s61
    %s65 = sadd.s32 0, 1
    %p66 = scmp.lt.s32.totalorder %s65, 1
    %s67 = scalar_select %p66, %s65, 1
    %s68 = ssub.s32 %s67, 1
    %s69 = sadd.s32 0, 0
    %p70 = scmp.lt.s32.totalorder %s69, %s68
    %s71 = scalar_select %p70, %s69, %s68
    %p72 = scmp.eq.s32.totalorder 0, 0
    // Predicated region
    $region18: #{tpu_custom_call.1} parent=1 // pred_check
      %p73 = pneg %p72
    $region19: #{tpu_custom_call.1} parent=1 // pred_check_branch
      %75 = sbr.rel (%p73) target = $region21
    $region20: #{tpu_custom_call.1} parent=1 // pred_region
      %vm76 = vcmask 25600
      %77 = vst.msk [vmem:[#allocation2] sm:$0x3] %vm76, 0.0
    $region21: #{tpu_custom_call.1} parent=1 // pred_fallthru
      _
    %s78 = sadd.s32 0, 0
    %p79 = scmp.lt.s32.totalorder %s78, 1
    // Predicated region
    $region22: #{tpu_custom_call.1} parent=1 // pred_check
      %p80 = pneg %p79
    $region23: #{tpu_custom_call.1} parent=1 // pred_check_branch
      %82 = sbr.rel (%p80) target = $region25
    $region24: #{tpu_custom_call.1} parent=1 // pred_region
      %v83 = vld [vmem:[#allocation3] sm:$0x3]
      %v84 = vld [vmem:[#allocation6] sm:$0x3]
      %vm85 = vcmask 1041408
      %v86 = vsel %vm85, %v83, -inf
      %87 = vmax.xlane.f32.xlu0 %v86
      %v88 = vpop.xlane.xlu0 %87
      %v89 = vsub.f32 %v83, %v88
      %v90 = vmul.f32 %v89, 1.442695
      %v91 = vpow.pop %v90
      %v92 = vlaneseq
      %v93 = vshrl.u32 %v92, 7
      %v94 = vlaneseq
      %v95 = vand.u32 %v94, 127
      %v96 = vmul.u32 %v93, 32
      %vm97 = vcmp.ge.s32.totalorder %v95, %v96
      %v98 = vadd.s32 %v96, 32
      %vm99 = vcmp.lt.s32.totalorder %v95, %v98
      %vm100 = vmand %vm97, %vm99
      %v101 = vsel %vm100, 1, 0
      %v102 = vcvt.s32.f32 %v101
      %103 = vmatpush.xpose.msra.mxu0 0.0
      %104 = vmatpush.xpose.msra.mxu0 0.0
      %105 = vmatpush.xpose.msra.mxu0 0.0
      %106 = vmatpush.xpose.msra.mxu0 0.0
      %107 = vmatpush.xpose.msra.mxu0 0.0
      %108 = vmatpush.xpose.msra.mxu0 0.0
      %109 = vmatpush.xpose.msra.mxu0 0.0
      %110 = vmatpush.xpose.msra.mxu0 0.0
      %111 = vmatpush.xpose.msra.mxu0 0.0
      %112 = vmatpush.xpose.msra.mxu0 0.0
      %113 = vmatpush.xpose.msra.mxu0 0.0
      %114 = vmatpush.xpose.msra.mxu0 0.0
      %115 = vmatpush.xpose.msra.mxu0 0.0
      %116 = vmatpush.xpose.msra.mxu0 0.0
      %117 = vmatpush.xpose.msra.mxu0 0.0
      %118 = vmatpush.xpose.msra.mxu0 %v102
      %119 = vmatmul.f32.gmra.mxu0 %v91
      %v120 = vpop.f32.mrf.mxu0
      %v121 = vadd.f32 0.0, %v120
      %122 = vdwg.mxu0
      %v123 = vmul.u32 %v95, 32
      %v124 = vadd.s32 %v84, %v123
      %v125 = vcvt.s32.f32 %v124
      %vm126 = vcmask 31744
      %v128 = vsel %vm126, %v125, 0
      %vm130 = vcmask 1043456
      %v132 = vsel %vm130, %v102, 0
      %134 = vmatpush.msra.mxu0 0.0
      %135 = vmatpush.msra.mxu0 0.0
      %136 = vmatpush.msra.mxu0 0.0
      %137 = vmatpush.msra.mxu0 0.0
      %138 = vmatpush.msra.mxu0 0.0
      %139 = vmatpush.msra.mxu0 0.0
      %140 = vmatpush.msra.mxu0 0.0
      %141 = vmatpush.msra.mxu0 0.0
      %142 = vmatpush.msra.mxu0 0.0
      %143 = vmatpush.msra.mxu0 0.0
      %144 = vmatpush.msra.mxu0 0.0
      %145 = vmatpush.msra.mxu0 0.0
      %146 = vmatpush.msra.mxu0 0.0
      %147 = vmatpush.msra.mxu0 0.0
      %148 = vmatpush.msra.mxu0 0.0
      %149 = vmatpush.msra.mxu0 %v132
      %150 = vmatmul.f32.gmra.mxu0 %v128
      %v151 = vpop.f32.mrf.mxu0
      %v152 = vadd.f32 0.0, %v151
      %153 = vdwg.mxu0
      %v154 = vcvt.f32.s32.to.zero.pseudo %v152
      %vm155 = vcmp.eq.s32.totalorder %v95, %v154
      %v156 = vsel %vm155, %v83, 0.0
      %157 = vmatpush.xpose.msra.mxu0 0.0
      %158 = vmatpush.xpose.msra.mxu0 0.0
      %159 = vmatpush.xpose.msra.mxu0 0.0
      %160 = vmatpush.xpose.msra.mxu0 0.0
      %161 = vmatpush.xpose.msra.mxu0 0.0
      %162 = vmatpush.xpose.msra.mxu0 0.0
      %163 = vmatpush.xpose.msra.mxu0 0.0
      %164 = vmatpush.xpose.msra.mxu0 0.0
      %165 = vmatpush.xpose.msra.mxu0 0.0
      %166 = vmatpush.xpose.msra.mxu0 0.0
      %167 = vmatpush.xpose.msra.mxu0 0.0
      %168 = vmatpush.xpose.msra.mxu0 0.0
      %169 = vmatpush.xpose.msra.mxu0 0.0
      %170 = vmatpush.xpose.msra.mxu0 0.0
      %171 = vmatpush.xpose.msra.mxu0 0.0
      %172 = vmatpush.xpose.msra.mxu0 %v102
      %173 = vmatmul.f32.gmra.mxu0 %v156
      %v174 = vpop.f32.mrf.mxu0
      %v175 = vadd.f32 0.0, %v174
      %176 = vdwg.mxu0
      %v177 = vmax.f32 %v121, 1e-37
      %v178 = vlog2.pop %v177
      %v179 = vmul.f32 %v178, 0.6931472
      %v180 = vadd.f32 %v88, %v179
      %v181 = vsub.f32 %v180, %v175
      %v182 = vsub.f32 %v175, %v180
      %v183 = vmul.f32 %v182, 1.442695
      %v184 = vpow.pop %v183
      %v185 = vsub.f32 1.0, %v184
      %v186 = vmul.f32 %v185, %v185
      %v187 = vmul.f32 %v186, %v181
      %s188 = smul.u32 %s78, 2
      %v189 = vstv %s188
      %v190 = vadd.s32 %v189, %v93
      %v191 = vmul.u32 %v190, 4
      %v192 = vadd.s32 %v191, %v95
      %vm193 = vcmp.lt.s32.totalorder %v192, 8
      %v194 = vsel %vm193, %v187, 0.0
      %v195 = vld [vmem:[#allocation2] sm:$0x3]
      %v196 = vadd.f32 %v195, %v194
      %vm197 = vcmask 25600
      %198 = vst.msk [vmem:[#allocation2] sm:$0x3] %vm197, %v196
    $region25: #{tpu_custom_call.1} parent=1 // pred_fallthru
      _
    // Predicated region
    $region26: #{tpu_custom_call.1} parent=1 // pred_check
      %p199 = pneg %p72
    $region27: #{tpu_custom_call.1} parent=1 // pred_check_branch
      %201 = sbr.rel (%p199) target = $region29
    $region28: #{tpu_custom_call.1} parent=1 // pred_region
      %v202 = vld [vmem:[#allocation2] sm:$0x3]
      %vm203 = vcmask 25600
      %v204 = vsel %vm203, %v202, 0.0
      %v205 = vrot.slane %v204, 4
      %v206 = vadd.f32 %v204, %v205
      %v207 = vrot.slane %v206, 2
      %v208 = vadd.f32 %v206, %v207
      %v209 = vrot.slane %v208, 1
      %v210 = vadd.f32 %v208, %v209
      %vm211 = vcmask 31744
      %v212 = vsel %vm211, %v210, 0.0
      %213 = vadd.xlane.f32.xlu0 %v212
      %v214 = vpop.xlane.xlu0 %213
      %215 = vst [vmem:[#allocation8] sm:$0xff] %v214
    $region29: #{tpu_custom_call.1} parent=1 // pred_fallthru
      _
    // Predicated region
    $region30: #{tpu_custom_call.1} parent=1 // pred_check
      _
    $region31: #{tpu_custom_call.1} parent=1 // pred_check_branch
      %217 = sbr.rel (0) target = $region33
    $region32: #{tpu_custom_call.1} parent=1 // pred_region
      %219 = vsyncadd [#allocation5], 0
      %s221 = sshll.u32 [#allocation8], 4
      %s222 = int_to_ptr.vmem [resolvable:$true] %s221
      %s223 = sshll.u32 %s2, 4
      %s224 = int_to_ptr.hbm [resolvable:$true] %s223
      %226 = dma.vmem_to_hbm [thread:$0]  %s222, 128, %s224, [#allocation5]
    $region33: #{tpu_custom_call.1} parent=1 // pred_fallthru
      _
    // Predicated region
    $region34: #{tpu_custom_call.1} parent=1 // pred_check
      _
    $region35: #{tpu_custom_call.1} parent=1 // pred_check_branch
      %228 = sbr.rel (0) target = $region37
    $region36: #{tpu_custom_call.1} parent=1 // pred_region
      %230 = dma.done [#allocation5], 128
    $region37: #{tpu_custom_call.1} parent=1 // pred_fallthru
      _
    %231 = vsyncpa [#allocation4], 1
    %232 = vsyncpa [#allocation7], 1
    %233 = vsyncpa [#allocation5], 1

</llo_original>
